<compile_context>
chip_gen: v7x
topology: tpu7x:2x2x1
jax: 0.10.0
libtpu: 0.0.40
codegen_flags: <defaults>
</compile_context>

<pallas_src>
import functools

import jax
import jax.numpy as jnp
from jax.experimental import pallas as pl
from jax.experimental.pallas import tpu as pltpu


LANE = 128          # lane width (last dim)
SUBLANE_BF16 = 16   # bf16 packs 16 rows per vreg


def _round_up(n, m):
    return ((n + m - 1) // m) * m


# ---------------------------------------------------------------------------
# Fused Pallas kernel: y = W_L @ relu(... relu(x @ W_1 + b_1) ...) + b_L
#   refs (n_layers > 1): x, w0, w_rest (L-1, Fp, Fp), biases (L, Fp), out
#   refs (n_layers == 1): x, w0, biases (1, Fp), out
# ---------------------------------------------------------------------------
def _mlp_fused_kernel(*refs, n_layers):
    if n_layers > 1:
        x_ref, w0_ref, wr_ref, b_ref, o_ref = refs
    else:
        x_ref, w0_ref, b_ref, o_ref = refs
        wr_ref = None

    # Layer 0: bf16 MXU matmul, f32 accumulate + bias.
    h32 = jnp.dot(x_ref[...], w0_ref[...],
                  preferred_element_type=jnp.float32)
    h32 = h32 + b_ref[0:1, :]

    # Layers 1..L-1: ReLU (f32) -> bf16 cast -> MXU -> f32 bias add.
    for i in range(1, n_layers):
        h_bf16 = jnp.maximum(h32, 0.0).astype(jnp.bfloat16)
        h32 = jnp.dot(h_bf16, wr_ref[i - 1],
                      preferred_element_type=jnp.float32) + b_ref[i:i + 1, :]

    o_ref[...] = h32.astype(o_ref.dtype)


# ---------------------------------------------------------------------------
# One-time (per NAS candidate) parameter packing: pad + cast to bf16 once.
# ---------------------------------------------------------------------------
def prepare_mlp_params(params):
    """params: list of (w, b) with w: (din, dout) f32, b: (dout,) f32.

    Returns (packed_arrays, meta) where packed_arrays = (w0_p, wr_p, b_p)
    and meta holds static shape info for the forward wrapper.
    """
    n_layers = len(params)
    dins = [w.shape[0] for (w, _) in params]
    douts = [w.shape[1] for (w, _) in params]
    for i in range(1, n_layers):
        assert dins[i] == douts[i - 1], "layer dims must chain"

    # One common lane-dense width for all hidden/output feature dims.  Extra
    # padded rows/cols stay exactly zero through bias add and ReLU, so the
    # valid columns are bit-exact; padding is sliced off after the kernel.
    Fp = _round_up(max(douts + dins[1:]), LANE)
    Din_p = _round_up(dins[0], LANE)

    w0_p = jnp.zeros((Din_p, Fp), jnp.bfloat16)
    w0_p = w0_p.at[:dins[0], :douts[0]].set(params[0][0].astype(jnp.bfloat16))

    if n_layers > 1:
        wr_p = jnp.zeros((n_layers - 1, Fp, Fp), jnp.bfloat16)
        for i in range(1, n_layers):
            wr_p = wr_p.at[i - 1, :dins[i], :douts[i]].set(
                params[i][0].astype(jnp.bfloat16))
    else:
        wr_p = None

    b_p = jnp.zeros((n_layers, Fp), jnp.float32)
    for i, (_, b) in enumerate(params):
        b_p = b_p.at[i, :douts[i]].set(b.astype(jnp.float32))

    meta = dict(n_layers=n_layers, dims=list(zip(dins, douts)),
                Din=dins[0], Dout=douts[-1], Din_p=Din_p, Fp=Fp)
    return (w0_p, wr_p, b_p), meta


# ---------------------------------------------------------------------------
# Forward: only flattens/pads the input; weights are already packed.
# ---------------------------------------------------------------------------
def mlp_forward_pallas(x, packed_params, meta):
    """x: (B, C, H, W) f32.  packed_params/meta from prepare_mlp_params."""
    w0_p, wr_p, b_p = packed_params
    n_layers = meta["n_layers"]
    Din, Dout = meta["Din"], meta["Dout"]
    Din_p, Fp = meta["Din_p"], meta["Fp"]

    B = x.shape[0]
    Bp = _round_up(max(B, SUBLANE_BF16), SUBLANE_BF16)  # bf16 sublane-dense

    # Single cast: flatten -> bf16 -> zero-padded (Bp, Din_p) slab.
    h = x.reshape(B, -1).astype(jnp.bfloat16)
    x_p = jnp.zeros((Bp, Din_p), jnp.bfloat16).at[:B, :Din].set(h)

    flat_args = [x_p, w0_p]
    in_specs = [
        pl.BlockSpec((Bp, Din_p), lambda: (0, 0)),
        pl.BlockSpec((Din_p, Fp), lambda: (0, 0)),
    ]
    if n_layers > 1:
        flat_args.append(wr_p)
        in_specs.append(pl.BlockSpec((n_layers - 1, Fp, Fp),
                                     lambda: (0, 0, 0)))
    flat_args.append(b_p)
    in_specs.append(pl.BlockSpec((n_layers, Fp), lambda: (0, 0)))

    # CostEstimate over TRUE (unpadded) dims.
    flops = 0
    bytes_accessed = B * Din * 2  # bf16 input
    for (din, dout) in meta["dims"]:
        flops += 2 * B * din * dout
        bytes_accessed += din * dout * 2 + dout * 4
    bytes_accessed += B * Dout * 4  # f32 output

    kernel = functools.partial(_mlp_fused_kernel, n_layers=n_layers)
    out_p = pl.pallas_call(
        kernel,
        out_shape=jax.ShapeDtypeStruct((Bp, Fp), jnp.float32),
        in_specs=in_specs,
        out_specs=pl.BlockSpec((Bp, Fp), lambda: (0, 0)),
        cost_estimate=pl.CostEstimate(
            flops=flops, transcendentals=0, bytes_accessed=bytes_accessed),
        compiler_params=pltpu.CompilerParams(
            vmem_limit_bytes=32 * 1024 * 1024),  # safe on v5e/v6e/v7x
    )(*flat_args)

    return out_p[:B, :Dout]


# ---------------------------------------------------------------------------
# MLP parameter construction (mimics nn.Linear's U(-1/sqrt(fan_in), ...))
# ---------------------------------------------------------------------------
def init_mlp_params(key, number_of_layers, input_shape, hidden_shape, output_shape):
    dims = []
    for l in range(number_of_layers):
        if l == 0:
            dims.append((input_shape, hidden_shape))
        elif l == number_of_layers - 1:
            dims.append((hidden_shape, output_shape))
        else:
            dims.append((hidden_shape, hidden_shape))

    params = []
    for (din, dout) in dims:
        key, kw, kb = jax.random.split(key, 3)
        bound = 1.0 / jnp.sqrt(jnp.float32(din))
        w = jax.random.uniform(kw, (din, dout), jnp.float32, -bound, bound)
        b = jax.random.uniform(kb, (dout,), jnp.float32, -bound, bound)
        params.append((w, b))
    return params


# ---------------------------------------------------------------------------
# References for sanity checks
# ---------------------------------------------------------------------------
def mlp_forward_ref_f32(x, params):
    """Pure f32 reference (original PyTorch numerics)."""
    B = x.shape[0]
    h = x.reshape(B, -1)
    n_layers = len(params)
    for i, (w, b) in enumerate(params):
        h = h @ w + b
        if i != n_layers - 1:
            h = jnp.maximum(h, 0.0)
    return h


def mlp_forward_ref_bf16(x, params):
    """Reference matching the kernel's bf16-input / f32-accumulate numerics."""
    B = x.shape[0]
    h = x.reshape(B, -1).astype(jnp.float32)
    n_layers = len(params)
    for i, (w, b) in enumerate(params):
        h = jnp.dot(h.astype(jnp.bfloat16), w.astype(jnp.bfloat16),
                    preferred_element_type=jnp.float32) + b
        if i != n_layers - 1:
            h = jnp.maximum(h, 0.0)
    return h


if __name__ == "__main__":
    key = jax.random.PRNGKey(0)
    k_x, k_p = jax.random.split(key)

    # Small NCHW input consistent with flatten(start_dim=1)
    B, C, H, W = 2, 4, 16, 16
    x = jax.random.normal(k_x, (B, C, H, W), jnp.float32)

    number_of_layers = 3
    input_shape = C * H * W      # 1024
    hidden_shape = 32
    output_shape = 10

    params = init_mlp_params(k_p, number_of_layers, input_shape,
                             hidden_shape, output_shape)

    # One-time per-candidate packing (hoisted out of the forward path).
    packed_params, meta = prepare_mlp_params(params)
    packed_params = jax.block_until_ready(packed_params)

    out = mlp_forward_pallas(x, packed_params, meta)
    out = jax.block_until_ready(out)
    assert out.shape == (B, output_shape)

    # Tight check against a reference with identical bf16-matmul numerics.
    ref_bf16 = mlp_forward_ref_bf16(x, params)
    assert jnp.allclose(out, ref_bf16, atol=1e-4, rtol=1e-4), \
        "mismatch vs bf16-matched reference"

    # Loose check against the pure-f32 (PyTorch-equivalent) reference.
    ref_f32 = mlp_forward_ref_f32(x, params)
    assert jnp.allclose(out, ref_f32, atol=5e-2, rtol=5e-2), \
        "mismatch vs f32 reference"

    print("KERNEL_OK")
</pallas_src>

<mosaic_0001>
module attributes {stable_mosaic.version = 11 : i64} {
  func.func @_mlp_fused_kernel(%arg0: memref<16x1024xbf16, #tpu.memory_space<vmem>>, %arg1: memref<1024x128xbf16, #tpu.memory_space<vmem>>, %arg2: memref<2x128x128xbf16, #tpu.memory_space<vmem>>, %arg3: memref<3x128xf32, #tpu.memory_space<vmem>>, %arg4: memref<16x128xf32, #tpu.memory_space<vmem>>) attributes {dimension_semantics = [], scalar_prefetch = 0 : i64, scratch_operands = 0 : i64, tpu.core_type = #tpu.core_type<tc>} {
    %c0 = arith.constant 0 : index
    %c0_0 = arith.constant 0 : index
    %0 = vector.load %arg0[%c0, %c0_0] : memref<16x1024xbf16, #tpu.memory_space<vmem>>, vector<16x1024xbf16>
    %c0_1 = arith.constant 0 : index
    %c0_2 = arith.constant 0 : index
    %1 = vector.load %arg1[%c0_1, %c0_2] : memref<1024x128xbf16, #tpu.memory_space<vmem>>, vector<1024x128xbf16>
    %cst = arith.constant dense<0.000000e+00> : vector<16x128xf32>
    %2 = tpu.matmul %0, %1, %cst {dimension_numbers = #tpu.dot_dimension_numbers<[1], [0], [0], [1], [0, 0, 1, 1], [], []>} : vector<16x1024xbf16>, vector<1024x128xbf16>, vector<16x128xf32> -> vector<16x128xf32>
    %c0_3 = arith.constant 0 : index
    %c0_4 = arith.constant 0 : index
    %3 = vector.load %arg3[%c0_3, %c0_4] : memref<3x128xf32, #tpu.memory_space<vmem>>, vector<1x128xf32>
    %4 = vector.broadcast %3 : vector<1x128xf32> to vector<16x128xf32>
    %5 = arith.addf %2, %4 : vector<16x128xf32>
    %cst_5 = arith.constant 0.000000e+00 : f32
    %6 = vector.broadcast %cst_5 : f32 to vector<16x128xf32>
    %7 = arith.maximumf %5, %6 : vector<16x128xf32>
    %8 = arith.truncf %7 : vector<16x128xf32> to vector<16x128xbf16>
    %c0_6 = arith.constant 0 : index
    %c0_7 = arith.constant 0 : index
    %c0_8 = arith.constant 0 : index
    %9 = vector.load %arg2[%c0_6, %c0_7, %c0_8] : memref<2x128x128xbf16, #tpu.memory_space<vmem>>, vector<1x128x128xbf16>
    %10 = vector.shape_cast %9 : vector<1x128x128xbf16> to vector<128x128xbf16>
    %cst_9 = arith.constant dense<0.000000e+00> : vector<16x128xf32>
    %11 = tpu.matmul %8, %10, %cst_9 {dimension_numbers = #tpu.dot_dimension_numbers<[1], [0], [0], [1], [0, 0, 1, 1], [], []>} : vector<16x128xbf16>, vector<128x128xbf16>, vector<16x128xf32> -> vector<16x128xf32>
    %c1 = arith.constant 1 : index
    %c0_10 = arith.constant 0 : index
    %12 = vector.load %arg3[%c1, %c0_10] : memref<3x128xf32, #tpu.memory_space<vmem>>, vector<1x128xf32>
    %13 = vector.broadcast %12 : vector<1x128xf32> to vector<16x128xf32>
    %14 = arith.addf %11, %13 : vector<16x128xf32>
    %cst_11 = arith.constant 0.000000e+00 : f32
    %15 = vector.broadcast %cst_11 : f32 to vector<16x128xf32>
    %16 = arith.maximumf %14, %15 : vector<16x128xf32>
    %17 = arith.truncf %16 : vector<16x128xf32> to vector<16x128xbf16>
    %c1_12 = arith.constant 1 : index
    %c0_13 = arith.constant 0 : index
    %c0_14 = arith.constant 0 : index
    %18 = vector.load %arg2[%c1_12, %c0_13, %c0_14] : memref<2x128x128xbf16, #tpu.memory_space<vmem>>, vector<1x128x128xbf16>
    %19 = vector.shape_cast %18 : vector<1x128x128xbf16> to vector<128x128xbf16>
    %cst_15 = arith.constant dense<0.000000e+00> : vector<16x128xf32>
    %20 = tpu.matmul %17, %19, %cst_15 {dimension_numbers = #tpu.dot_dimension_numbers<[1], [0], [0], [1], [0, 0, 1, 1], [], []>} : vector<16x128xbf16>, vector<128x128xbf16>, vector<16x128xf32> -> vector<16x128xf32>
    %c2 = arith.constant 2 : index
    %c0_16 = arith.constant 0 : index
    %21 = vector.load %arg3[%c2, %c0_16] : memref<3x128xf32, #tpu.memory_space<vmem>>, vector<1x128xf32>
    %22 = vector.broadcast %21 : vector<1x128xf32> to vector<16x128xf32>
    %23 = arith.addf %20, %22 : vector<16x128xf32>
    %c0_17 = arith.constant 0 : index
    %c0_18 = arith.constant 0 : index
    %24 = vector.load %arg4[%c0_17, %c0_18] : memref<16x128xf32, #tpu.memory_space<vmem>>, vector<16x128xf32>
    tpu.vector_store %arg4[%c0_17, %c0_18], %23 {strides = array<i32>} : memref<16x128xf32, #tpu.memory_space<vmem>>, vector<16x128xf32>,
    return
  }
}

</mosaic_0001>

<llo_original>
// kernel: tpu_custom_call.1
$region0: #{tpu_custom_call.1}
  #allocation0 [shape = 'u32[]', space=smem, size = 0x4, offset = 0x4, fixed_abs, tag = 'smem constant byte address 0x4 - core index']
  #allocation1 [shape = 'u32[144,128]{1,0:T(1,128)}', space=vmem, size = 0x12000, scoped, tag = 'internal scratch']
  %s0 = inlined_call_operand.hbm [shape: bf16[16,1024], index: 0, kind: input, shape index: {}]
  %s1 = inlined_call_operand.hbm [shape: bf16[1024,128], index: 1, kind: input, shape index: {}]
  %s2 = inlined_call_operand.hbm [shape: bf16[2,128,128], index: 2, kind: input, shape index: {}]
  %s3 = inlined_call_operand.vmem [shape: f32[3,128], index: 3, kind: input, shape index: {}]
  %s4 = inlined_call_operand.hbm [shape: f32[16,128], index: 4, kind: output, shape index: {}]
  %s5 = sld [smem:[#allocation0]]
  $region38: #{tpu_custom_call.1} parent=0
    _
  %s7 = ssub.s32 1, %s5
  %s8 = scalar_select 0, %s7, %s5
  $region1: #{tpu_custom_call.1} parent=0
    #allocation2 [shape = 'u8[32768]{0}', space=vmem, size = 0x8000, scoped, tag = 'input window, operand 0, single buffered']
    #allocation3 [shape = 's32[1]{0}', space=sflag, size = 0x4, scoped, tag = 'scoped memory for tpu_custom_call.1']
    #allocation4 [shape = 's32[1]{0}', space=sflag, size = 0x4, scoped, tag = 'scoped memory for tpu_custom_call.1']
    #allocation5 [shape = 'u8[262144]{0}', space=vmem, size = 0x40000, scoped, tag = 'input window, operand 1, single buffered']
    #allocation6 [shape = 's32[1]{0}', space=sflag, size = 0x4, scoped, tag = 'scoped memory for tpu_custom_call.1']
    #allocation7 [shape = 'u8[65536]{0}', space=vmem, size = 0x10000, scoped, tag = 'input window, operand 2, single buffered']
    #allocation8 [shape = 'u8[8192]{0}', space=vmem, size = 0x2000, scoped, tag = 'output window, operand 0, single buffered']
    %9 = vsyncpa [#allocation3], 0
    %10 = vsyncpa [#allocation6], 0
    %11 = vsyncpa [#allocation4], 0
    // Predicated region
    $region2: #{tpu_custom_call.1} parent=1 // pred_check
      _
    $region3: #{tpu_custom_call.1} parent=1 // pred_check_branch
      %13 = sbr.rel (0) target = $region5
    $region4: #{tpu_custom_call.1} parent=1 // pred_region
      %s15 = ssub.s32 1024, 1024
      %16 = vsyncadd [#allocation3], %s15
      %s17 = sshll.u32 [#allocation2], 4
      %s18 = int_to_ptr.vmem [resolvable:$true] %s17
      %23 = dma.hbm_to_vmem [thread:$0]  %s0, 1024, %s18, [#allocation3], 512, 512, 32
    $region5: #{tpu_custom_call.1} parent=1 // pred_fallthru
      _
    // Predicated region
    $region6: #{tpu_custom_call.1} parent=1 // pred_check
      _
    $region7: #{tpu_custom_call.1} parent=1 // pred_check_branch
      %25 = sbr.rel (0) target = $region9
    $region8: #{tpu_custom_call.1} parent=1 // pred_region
      %s27 = ssub.s32 8192, 8192
      %28 = vsyncadd [#allocation6], %s27
      %s29 = sshll.u32 [#allocation5], 4
      %s30 = int_to_ptr.vmem [resolvable:$true] %s29
      %35 = dma.hbm_to_vmem [thread:$0]  %s1, 8192, %s30, [#allocation6], 64, 64, 4
    $region9: #{tpu_custom_call.1} parent=1 // pred_fallthru
      _
    // Predicated region
    $region10: #{tpu_custom_call.1} parent=1 // pred_check
      _
    $region11: #{tpu_custom_call.1} parent=1 // pred_check_branch
      %37 = sbr.rel (0) target = $region13
    $region12: #{tpu_custom_call.1} parent=1 // pred_region
      %s39 = ssub.s32 2048, 2048
      %40 = vsyncadd [#allocation6], %s39
      %s41 = sshll.u32 [#allocation7], 4
      %s42 = int_to_ptr.vmem [resolvable:$true] %s41
      %47 = dma.hbm_to_vmem [thread:$0]  %s2, 2048, %s42, [#allocation6], 64, 64, 4
    $region13: #{tpu_custom_call.1} parent=1 // pred_fallthru
      _
    // Predicated region
    $region14: #{tpu_custom_call.1} parent=1 // pred_check
      _
    $region15: #{tpu_custom_call.1} parent=1 // pred_check_branch
      %49 = sbr.rel (0) target = $region17
    $region16: #{tpu_custom_call.1} parent=1 // pred_region
      _
    $region17: #{tpu_custom_call.1} parent=1 // pred_fallthru
      _
    // Predicated region
    $region18: #{tpu_custom_call.1} parent=1 // pred_check
      _
    $region19: #{tpu_custom_call.1} parent=1 // pred_check_branch
      %51 = sbr.rel (0) target = $region21
    $region20: #{tpu_custom_call.1} parent=1 // pred_region
      %52 = dma.done [#allocation3], 1024
    $region21: #{tpu_custom_call.1} parent=1 // pred_fallthru
      _
    // Predicated region
    $region22: #{tpu_custom_call.1} parent=1 // pred_check
      _
    $region23: #{tpu_custom_call.1} parent=1 // pred_check_branch
      %54 = sbr.rel (0) target = $region25
    $region24: #{tpu_custom_call.1} parent=1 // pred_region
      %55 = dma.done [#allocation6], 8192
    $region25: #{tpu_custom_call.1} parent=1 // pred_fallthru
      _
    // Predicated region
    $region26: #{tpu_custom_call.1} parent=1 // pred_check
      _
    $region27: #{tpu_custom_call.1} parent=1 // pred_check_branch
      %57 = sbr.rel (0) target = $region29
    $region28: #{tpu_custom_call.1} parent=1 // pred_region
      %58 = dma.done [#allocation6], 2048
    $region29: #{tpu_custom_call.1} parent=1 // pred_fallthru
      _
    %v60 = vld [vmem:[#allocation2] sm:$0xff]
    %v61 = vld [vmem:[#allocation2 + $0x8] sm:$0xff]
    %v62 = vld [vmem:[#allocation2 + $0x10] sm:$0xff]
    %v63 = vld [vmem:[#allocation2 + $0x18] sm:$0xff]
    %v64 = vld [vmem:[#allocation2 + $0x20] sm:$0xff]
    %v65 = vld [vmem:[#allocation2 + $0x28] sm:$0xff]
    %v66 = vld [vmem:[#allocation2 + $0x30] sm:$0xff]
    %v67 = vld [vmem:[#allocation2 + $0x38] sm:$0xff]
    %v68 = vld [vmem:[#allocation5] sm:$0xf]
    %v69 = vld [vmem:[#allocation5 + $0x4] sm:$0xf]
    %v70 = vld [vmem:[#allocation5 + $0x8] sm:$0xf]
    %v71 = vld [vmem:[#allocation5 + $0xc] sm:$0xf]
    %v72 = vld [vmem:[#allocation5 + $0x10] sm:$0xf]
    %v73 = vld [vmem:[#allocation5 + $0x14] sm:$0xf]
    %v74 = vld [vmem:[#allocation5 + $0x18] sm:$0xf]
    %v75 = vld [vmem:[#allocation5 + $0x1c] sm:$0xf]
    %v76 = vld [vmem:[#allocation5 + $0x20] sm:$0xf]
    %v77 = vld [vmem:[#allocation5 + $0x24] sm:$0xf]
    %v78 = vld [vmem:[#allocation5 + $0x28] sm:$0xf]
    %v79 = vld [vmem:[#allocation5 + $0x2c] sm:$0xf]
    %v80 = vld [vmem:[#allocation5 + $0x30] sm:$0xf]
    %v81 = vld [vmem:[#allocation5 + $0x34] sm:$0xf]
    %v82 = vld [vmem:[#allocation5 + $0x38] sm:$0xf]
    %v83 = vld [vmem:[#allocation5 + $0x3c] sm:$0xf]
    %v84 = vld [vmem:[#allocation5 + $0x40] sm:$0xf]
    %v85 = vld [vmem:[#allocation5 + $0x44] sm:$0xf]
    %v86 = vld [vmem:[#allocation5 + $0x48] sm:$0xf]
    %v87 = vld [vmem:[#allocation5 + $0x4c] sm:$0xf]
    %v88 = vld [vmem:[#allocation5 + $0x50] sm:$0xf]
    %v89 = vld [vmem:[#allocation5 + $0x54] sm:$0xf]
    %v90 = vld [vmem:[#allocation5 + $0x58] sm:$0xf]
    %v91 = vld [vmem:[#allocation5 + $0x5c] sm:$0xf]
    %v92 = vld [vmem:[#allocation5 + $0x60] sm:$0xf]
    %v93 = vld [vmem:[#allocation5 + $0x64] sm:$0xf]
    %v94 = vld [vmem:[#allocation5 + $0x68] sm:$0xf]
    %v95 = vld [vmem:[#allocation5 + $0x6c] sm:$0xf]
    %v96 = vld [vmem:[#allocation5 + $0x70] sm:$0xf]
    %v97 = vld [vmem:[#allocation5 + $0x74] sm:$0xf]
    %v98 = vld [vmem:[#allocation5 + $0x78] sm:$0xf]
    %v99 = vld [vmem:[#allocation5 + $0x7c] sm:$0xf]
    %v100 = vld [vmem:[#allocation5 + $0x80] sm:$0xf]
    %v101 = vld [vmem:[#allocation5 + $0x84] sm:$0xf]
    %v102 = vld [vmem:[#allocation5 + $0x88] sm:$0xf]
    %v103 = vld [vmem:[#allocation5 + $0x8c] sm:$0xf]
    %v104 = vld [vmem:[#allocation5 + $0x90] sm:$0xf]
    %v105 = vld [vmem:[#allocation5 + $0x94] sm:$0xf]
    %v106 = vld [vmem:[#allocation5 + $0x98] sm:$0xf]
    %v107 = vld [vmem:[#allocation5 + $0x9c] sm:$0xf]
    %v108 = vld [vmem:[#allocation5 + $0xa0] sm:$0xf]
    %v109 = vld [vmem:[#allocation5 + $0xa4] sm:$0xf]
    %v110 = vld [vmem:[#allocation5 + $0xa8] sm:$0xf]
    %v111 = vld [vmem:[#allocation5 + $0xac] sm:$0xf]
    %v112 = vld [vmem:[#allocation5 + $0xb0] sm:$0xf]
    %v113 = vld [vmem:[#allocation5 + $0xb4] sm:$0xf]
    %v114 = vld [vmem:[#allocation5 + $0xb8] sm:$0xf]
    %v115 = vld [vmem:[#allocation5 + $0xbc] sm:$0xf]
    %v116 = vld [vmem:[#allocation5 + $0xc0] sm:$0xf]
    %v117 = vld [vmem:[#allocation5 + $0xc4] sm:$0xf]
    %v118 = vld [vmem:[#allocation5 + $0xc8] sm:$0xf]
    %v119 = vld [vmem:[#allocation5 + $0xcc] sm:$0xf]
    %v120 = vld [vmem:[#allocation5 + $0xd0] sm:$0xf]
    %v121 = vld [vmem:[#allocation5 + $0xd4] sm:$0xf]
    %v122 = vld [vmem:[#allocation5 + $0xd8] sm:$0xf]
    %v123 = vld [vmem:[#allocation5 + $0xdc] sm:$0xf]
    %v124 = vld [vmem:[#allocation5 + $0xe0] sm:$0xf]
    %v125 = vld [vmem:[#allocation5 + $0xe4] sm:$0xf]
    %v126 = vld [vmem:[#allocation5 + $0xe8] sm:$0xf]
    %v127 = vld [vmem:[#allocation5 + $0xec] sm:$0xf]
    %v128 = vld [vmem:[#allocation5 + $0xf0] sm:$0xf]
    %v129 = vld [vmem:[#allocation5 + $0xf4] sm:$0xf]
    %v130 = vld [vmem:[#allocation5 + $0xf8] sm:$0xf]
    %v131 = vld [vmem:[#allocation5 + $0xfc] sm:$0xf]
    %v132 = vld [vmem:[#allocation5 + $0x100] sm:$0xf]
    %v133 = vld [vmem:[#allocation5 + $0x104] sm:$0xf]
    %v134 = vld [vmem:[#allocation5 + $0x108] sm:$0xf]
    %v135 = vld [vmem:[#allocation5 + $0x10c] sm:$0xf]
    %v136 = vld [vmem:[#allocation5 + $0x110] sm:$0xf]
    %v137 = vld [vmem:[#allocation5 + $0x114] sm:$0xf]
    %v138 = vld [vmem:[#allocation5 + $0x118] sm:$0xf]
    %v139 = vld [vmem:[#allocation5 + $0x11c] sm:$0xf]
    %v140 = vld [vmem:[#allocation5 + $0x120] sm:$0xf]
    %v141 = vld [vmem:[#allocation5 + $0x124] sm:$0xf]
    %v142 = vld [vmem:[#allocation5 + $0x128] sm:$0xf]
    %v143 = vld [vmem:[#allocation5 + $0x12c] sm:$0xf]
    %v144 = vld [vmem:[#allocation5 + $0x130] sm:$0xf]
    %v145 = vld [vmem:[#allocation5 + $0x134] sm:$0xf]
    %v146 = vld [vmem:[#allocation5 + $0x138] sm:$0xf]
    %v147 = vld [vmem:[#allocation5 + $0x13c] sm:$0xf]
    %v148 = vld [vmem:[#allocation5 + $0x140] sm:$0xf]
    %v149 = vld [vmem:[#allocation5 + $0x144] sm:$0xf]
    %v150 = vld [vmem:[#allocation5 + $0x148] sm:$0xf]
    %v151 = vld [vmem:[#allocation5 + $0x14c] sm:$0xf]
    %v152 = vld [vmem:[#allocation5 + $0x150] sm:$0xf]
    %v153 = vld [vmem:[#allocation5 + $0x154] sm:$0xf]
    %v154 = vld [vmem:[#allocation5 + $0x158] sm:$0xf]
    %v155 = vld [vmem:[#allocation5 + $0x15c] sm:$0xf]
    %v156 = vld [vmem:[#allocation5 + $0x160] sm:$0xf]
    %v157 = vld [vmem:[#allocation5 + $0x164] sm:$0xf]
    %v158 = vld [vmem:[#allocation5 + $0x168] sm:$0xf]
    %v159 = vld [vmem:[#allocation5 + $0x16c] sm:$0xf]
    %v160 = vld [vmem:[#allocation5 + $0x170] sm:$0xf]
    %v161 = vld [vmem:[#allocation5 + $0x174] sm:$0xf]
    %v162 = vld [vmem:[#allocation5 + $0x178] sm:$0xf]
    %v163 = vld [vmem:[#allocation5 + $0x17c] sm:$0xf]
    %v164 = vld [vmem:[#allocation5 + $0x180] sm:$0xf]
    %v165 = vld [vmem:[#allocation5 + $0x184] sm:$0xf]
    %v166 = vld [vmem:[#allocation5 + $0x188] sm:$0xf]
    %v167 = vld [vmem:[#allocation5 + $0x18c] sm:$0xf]
    %v168 = vld [vmem:[#allocation5 + $0x190] sm:$0xf]
    %v169 = vld [vmem:[#allocation5 + $0x194] sm:$0xf]
    %v170 = vld [vmem:[#allocation5 + $0x198] sm:$0xf]
    %v171 = vld [vmem:[#allocation5 + $0x19c] sm:$0xf]
    %v172 = vld [vmem:[#allocation5 + $0x1a0] sm:$0xf]
    %v173 = vld [vmem:[#allocation5 + $0x1a4] sm:$0xf]
    %v174 = vld [vmem:[#allocation5 + $0x1a8] sm:$0xf]
    %v175 = vld [vmem:[#allocation5 + $0x1ac] sm:$0xf]
    %v176 = vld [vmem:[#allocation5 + $0x1b0] sm:$0xf]
    %v177 = vld [vmem:[#allocation5 + $0x1b4] sm:$0xf]
    %v178 = vld [vmem:[#allocation5 + $0x1b8] sm:$0xf]
    %v179 = vld [vmem:[#allocation5 + $0x1bc] sm:$0xf]
    %v180 = vld [vmem:[#allocation5 + $0x1c0] sm:$0xf]
    %v181 = vld [vmem:[#allocation5 + $0x1c4] sm:$0xf]
    %v182 = vld [vmem:[#allocation5 + $0x1c8] sm:$0xf]
    %v183 = vld [vmem:[#allocation5 + $0x1cc] sm:$0xf]
    %v184 = vld [vmem:[#allocation5 + $0x1d0] sm:$0xf]
    %v185 = vld [vmem:[#allocation5 + $0x1d4] sm:$0xf]
    %v186 = vld [vmem:[#allocation5 + $0x1d8] sm:$0xf]
    %v187 = vld [vmem:[#allocation5 + $0x1dc] sm:$0xf]
    %v188 = vld [vmem:[#allocation5 + $0x1e0] sm:$0xf]
    %v189 = vld [vmem:[#allocation5 + $0x1e4] sm:$0xf]
    %v190 = vld [vmem:[#allocation5 + $0x1e8] sm:$0xf]
    %v191 = vld [vmem:[#allocation5 + $0x1ec] sm:$0xf]
    %v192 = vld [vmem:[#allocation5 + $0x1f0] sm:$0xf]
    %v193 = vld [vmem:[#allocation5 + $0x1f4] sm:$0xf]
    %v194 = vld [vmem:[#allocation5 + $0x1f8] sm:$0xf]
    %v195 = vld [vmem:[#allocation5 + $0x1fc] sm:$0xf]
    %v196 = vld [vmem:[%s3] sm:$0x1]
    %v197 = vlaneseq
    %v198 = vshrl.u32 %v197, 7
    %v199 = vsub.s32 0, %v198
    %v200 = vrot.slane %v196, %v199
    %v209 = vunpack.c.l.b16 %v60
    %v210 = vunpack.c.h.b16 %v60
    %v211 = vunpack.c.l.b16 %v61
    %v212 = vunpack.c.h.b16 %v61
    %v213 = vunpack.c.l.b16 %v62
    %v214 = vunpack.c.h.b16 %v62
    %v215 = vunpack.c.l.b16 %v63
    %v216 = vunpack.c.h.b16 %v63
    %v217 = vunpack.c.l.b16 %v64
    %v218 = vunpack.c.h.b16 %v64
    %v219 = vunpack.c.l.b16 %v65
    %v220 = vunpack.c.h.b16 %v65
    %v221 = vunpack.c.l.b16 %v66
    %v222 = vunpack.c.h.b16 %v66
    %v223 = vunpack.c.l.b16 %v67
    %v224 = vunpack.c.h.b16 %v67
    %v225 = vpack.c.b16 %v217, %v209
    %v226 = vpack.c.b16 %v218, %v210
    %v227 = vpack.c.b16 %v219, %v211
    %v228 = vpack.c.b16 %v220, %v212
    %v229 = vpack.c.b16 %v221, %v213
    %v230 = vpack.c.b16 %v222, %v214
    %v231 = vpack.c.b16 %v223, %v215
    %v232 = vpack.c.b16 %v224, %v216
    %v369 = vunpack.c.l.b16 %v68
    %v370 = vunpack.c.l.b16 %v69
    %v371 = vunpack.c.l.b16 %v70
    %v372 = vunpack.c.l.b16 %v71
    %v373 = vunpack.c.l.b16 %v72
    %v374 = vunpack.c.l.b16 %v73
    %v375 = vunpack.c.l.b16 %v74
    %v376 = vunpack.c.l.b16 %v75
    %v377 = vunpack.c.l.b16 %v76
    %v378 = vunpack.c.l.b16 %v77
    %v379 = vunpack.c.l.b16 %v78
    %v380 = vunpack.c.l.b16 %v79
    %v381 = vunpack.c.l.b16 %v80
    %v382 = vunpack.c.l.b16 %v81
    %v383 = vunpack.c.l.b16 %v82
    %v384 = vunpack.c.l.b16 %v83
    %v385 = vunpack.c.l.b16 %v84
    %v386 = vunpack.c.l.b16 %v85
    %v387 = vunpack.c.l.b16 %v86
    %v388 = vunpack.c.l.b16 %v87
    %v389 = vunpack.c.l.b16 %v88
    %v390 = vunpack.c.l.b16 %v89
    %v391 = vunpack.c.l.b16 %v90
    %v392 = vunpack.c.l.b16 %v91
    %v393 = vunpack.c.l.b16 %v92
    %v394 = vunpack.c.l.b16 %v93
    %v395 = vunpack.c.l.b16 %v94
    %v396 = vunpack.c.l.b16 %v95
    %v397 = vunpack.c.l.b16 %v96
    %v398 = vunpack.c.l.b16 %v97
    %v399 = vunpack.c.l.b16 %v98
    %v400 = vunpack.c.l.b16 %v99
    %v401 = vunpack.c.l.b16 %v100
    %v402 = vunpack.c.l.b16 %v101
    %v403 = vunpack.c.l.b16 %v102
    %v404 = vunpack.c.l.b16 %v103
    %v405 = vunpack.c.l.b16 %v104
    %v406 = vunpack.c.l.b16 %v105
    %v407 = vunpack.c.l.b16 %v106
    %v408 = vunpack.c.l.b16 %v107
    %v409 = vunpack.c.l.b16 %v108
    %v410 = vunpack.c.l.b16 %v109
    %v411 = vunpack.c.l.b16 %v110
    %v412 = vunpack.c.l.b16 %v111
    %v413 = vunpack.c.l.b16 %v112
    %v414 = vunpack.c.l.b16 %v113
    %v415 = vunpack.c.l.b16 %v114
    %v416 = vunpack.c.l.b16 %v115
    %v417 = vunpack.c.l.b16 %v116
    %v418 = vunpack.c.l.b16 %v117
    %v419 = vunpack.c.l.b16 %v118
    %v420 = vunpack.c.l.b16 %v119
    %v421 = vunpack.c.l.b16 %v120
    %v422 = vunpack.c.l.b16 %v121
    %v423 = vunpack.c.l.b16 %v122
    %v424 = vunpack.c.l.b16 %v123
    %v425 = vunpack.c.l.b16 %v124
    %v426 = vunpack.c.l.b16 %v125
    %v427 = vunpack.c.l.b16 %v126
    %v428 = vunpack.c.l.b16 %v127
    %v429 = vunpack.c.l.b16 %v128
    %v430 = vunpack.c.l.b16 %v129
    %v431 = vunpack.c.l.b16 %v130
    %v432 = vunpack.c.l.b16 %v131
    %v433 = vunpack.c.l.b16 %v132
    %v434 = vunpack.c.l.b16 %v133
    %v435 = vunpack.c.l.b16 %v134
    %v436 = vunpack.c.l.b16 %v135
    %v437 = vunpack.c.l.b16 %v136
    %v438 = vunpack.c.l.b16 %v137
    %v439 = vunpack.c.l.b16 %v138
    %v440 = vunpack.c.l.b16 %v139
    %v441 = vunpack.c.l.b16 %v140
    %v442 = vunpack.c.l.b16 %v141
    %v443 = vunpack.c.l.b16 %v142
    %v444 = vunpack.c.l.b16 %v143
    %v445 = vunpack.c.l.b16 %v144
    %v446 = vunpack.c.l.b16 %v145
    %v447 = vunpack.c.l.b16 %v146
    %v448 = vunpack.c.l.b16 %v147
    %v449 = vunpack.c.l.b16 %v148
    %v450 = vunpack.c.l.b16 %v149
    %v451 = vunpack.c.l.b16 %v150
    %v452 = vunpack.c.l.b16 %v151
    %v453 = vunpack.c.l.b16 %v152
    %v454 = vunpack.c.l.b16 %v153
    %v455 = vunpack.c.l.b16 %v154
    %v456 = vunpack.c.l.b16 %v155
    %v457 = vunpack.c.l.b16 %v156
    %v458 = vunpack.c.l.b16 %v157
    %v459 = vunpack.c.l.b16 %v158
    %v460 = vunpack.c.l.b16 %v159
    %v461 = vunpack.c.l.b16 %v160
    %v462 = vunpack.c.l.b16 %v161
    %v463 = vunpack.c.l.b16 %v162
    %v464 = vunpack.c.l.b16 %v163
    %v465 = vunpack.c.l.b16 %v164
    %v466 = vunpack.c.l.b16 %v165
    %v467 = vunpack.c.l.b16 %v166
    %v468 = vunpack.c.l.b16 %v167
    %v469 = vunpack.c.l.b16 %v168
    %v470 = vunpack.c.l.b16 %v169
    %v471 = vunpack.c.l.b16 %v170
    %v472 = vunpack.c.l.b16 %v171
    %v473 = vunpack.c.l.b16 %v172
    %v474 = vunpack.c.l.b16 %v173
    %v475 = vunpack.c.l.b16 %v174
    %v476 = vunpack.c.l.b16 %v175
    %v477 = vunpack.c.l.b16 %v176
    %v478 = vunpack.c.l.b16 %v177
    %v479 = vunpack.c.l.b16 %v178
    %v480 = vunpack.c.l.b16 %v179
    %v481 = vunpack.c.l.b16 %v180
    %v482 = vunpack.c.l.b16 %v181
    %v483 = vunpack.c.l.b16 %v182
    %v484 = vunpack.c.l.b16 %v183
    %v485 = vunpack.c.l.b16 %v184
    %v486 = vunpack.c.l.b16 %v185
    %v487 = vunpack.c.l.b16 %v186
    %v488 = vunpack.c.l.b16 %v187
    %v489 = vunpack.c.l.b16 %v188
    %v490 = vunpack.c.l.b16 %v189
    %v491 = vunpack.c.l.b16 %v190
    %v492 = vunpack.c.l.b16 %v191
    %v493 = vunpack.c.l.b16 %v192
    %v494 = vunpack.c.l.b16 %v193
    %v495 = vunpack.c.l.b16 %v194
    %v496 = vunpack.c.l.b16 %v195
    %v497 = vpack.c.b16 %v370, %v369
    %v498 = vpack.c.b16 %v372, %v371
    %v499 = vpack.c.b16 %v374, %v373
    %v500 = vpack.c.b16 %v376, %v375
    %v501 = vpack.c.b16 %v378, %v377
    %v502 = vpack.c.b16 %v380, %v379
    %v503 = vpack.c.b16 %v382, %v381
    %v504 = vpack.c.b16 %v384, %v383
    %v505 = vpack.c.b16 %v386, %v385
    %v506 = vpack.c.b16 %v388, %v387
    %v507 = vpack.c.b16 %v390, %v389
    %v508 = vpack.c.b16 %v392, %v391
    %v509 = vpack.c.b16 %v394, %v393
    %v510 = vpack.c.b16 %v396, %v395
    %v511 = vpack.c.b16 %v398, %v397
    %v512 = vpack.c.b16 %v400, %v399
    %v513 = vpack.c.b16 %v402, %v401
    %v514 = vpack.c.b16 %v404, %v403
    %v515 = vpack.c.b16 %v406, %v405
    %v516 = vpack.c.b16 %v408, %v407
    %v517 = vpack.c.b16 %v410, %v409
    %v518 = vpack.c.b16 %v412, %v411
    %v519 = vpack.c.b16 %v414, %v413
    %v520 = vpack.c.b16 %v416, %v415
    %v521 = vpack.c.b16 %v418, %v417
    %v522 = vpack.c.b16 %v420, %v419
    %v523 = vpack.c.b16 %v422, %v421
    %v524 = vpack.c.b16 %v424, %v423
    %v525 = vpack.c.b16 %v426, %v425
    %v526 = vpack.c.b16 %v428, %v427
    %v527 = vpack.c.b16 %v430, %v429
    %v528 = vpack.c.b16 %v432, %v431
    %v529 = vpack.c.b16 %v434, %v433
    %v530 = vpack.c.b16 %v436, %v435
    %v531 = vpack.c.b16 %v438, %v437
    %v532 = vpack.c.b16 %v440, %v439
    %v533 = vpack.c.b16 %v442, %v441
    %v534 = vpack.c.b16 %v444, %v443
    %v535 = vpack.c.b16 %v446, %v445
    %v536 = vpack.c.b16 %v448, %v447
    %v537 = vpack.c.b16 %v450, %v449
    %v538 = vpack.c.b16 %v452, %v451
    %v539 = vpack.c.b16 %v454, %v453
    %v540 = vpack.c.b16 %v456, %v455
    %v541 = vpack.c.b16 %v458, %v457
    %v542 = vpack.c.b16 %v460, %v459
    %v543 = vpack.c.b16 %v462, %v461
    %v544 = vpack.c.b16 %v464, %v463
    %v545 = vpack.c.b16 %v466, %v465
    %v546 = vpack.c.b16 %v468, %v467
    %v547 = vpack.c.b16 %v470, %v469
    %v548 = vpack.c.b16 %v472, %v471
    %v549 = vpack.c.b16 %v474, %v473
    %v550 = vpack.c.b16 %v476, %v475
    %v551 = vpack.c.b16 %v478, %v477
    %v552 = vpack.c.b16 %v480, %v479
    %v553 = vpack.c.b16 %v482, %v481
    %v554 = vpack.c.b16 %v484, %v483
    %v555 = vpack.c.b16 %v486, %v485
    %v556 = vpack.c.b16 %v488, %v487
    %v557 = vpack.c.b16 %v490, %v489
    %v558 = vpack.c.b16 %v492, %v491
    %v559 = vpack.c.b16 %v494, %v493
    %v560 = vpack.c.b16 %v496, %v495
    %625 = vmatprep.subr.bf16.mxu0 0
    %626 = vmatpush1.bf16.msra.mxu0 %v497
    %627 = vmatprep.subr.bf16.mxu0 0
    %628 = vmatpush1.bf16.msra.mxu0 %v498
    %629 = vmatprep.subr.bf16.mxu0 0
    %630 = vmatpush1.bf16.msra.mxu0 %v499
    %631 = vmatprep.subr.bf16.mxu0 0
    %632 = vmatpush1.bf16.msra.mxu0 %v500
    %633 = vmatprep.subr.bf16.mxu0 0
    %634 = vmatpush1.bf16.msra.mxu0 %v501
    %635 = vmatprep.subr.bf16.mxu0 0
    %636 = vmatpush1.bf16.msra.mxu0 %v502
    %637 = vmatprep.subr.bf16.mxu0 0
    %638 = vmatpush1.bf16.msra.mxu0 %v503
    %639 = vmatprep.subr.bf16.mxu0 0
    %640 = vmatpush1.bf16.msra.mxu0 %v504
    %641 = vmatprep.subr.bf16.mxu0 0
    %642 = vmatpush1.bf16.msra.mxu0 %v505
    %643 = vmatprep.subr.bf16.mxu0 0
    %644 = vmatpush1.bf16.msra.mxu0 %v506
    %645 = vmatprep.subr.bf16.mxu0 0
    %646 = vmatpush1.bf16.msra.mxu0 %v507
    %647 = vmatprep.subr.bf16.mxu0 0
    %648 = vmatpush1.bf16.msra.mxu0 %v508
    %649 = vmatprep.subr.bf16.mxu0 0
    %650 = vmatpush1.bf16.msra.mxu0 %v509
    %651 = vmatprep.subr.bf16.mxu0 0
    %652 = vmatpush1.bf16.msra.mxu0 %v510
    %653 = vmatprep.subr.bf16.mxu0 0
    %654 = vmatpush1.bf16.msra.mxu0 %v511
    %655 = vmatprep.subr.bf16.mxu0 0
    %656 = vmatpush1.bf16.msra.mxu0 %v512
    %657 = vmatprep.mubr.bf16.mxu0 %v226
    %658 = vmatmul.mubr.bf16.gmra.mrb[0].mxu0 %v225
    %v659 = vpop.f32.mrb[0].mxu0
    %v660 = vadd.f32 %v200, %v659
    %v661 = vpop.f32.mrb[0].mxu0
    %v662 = vpop.f32.mrb[0].mxu0
    %v663 = vadd.f32 %v200, %v662
    %v664 = vpop.f32.mrb[0].mxu0
    %665 = vdwg.mxu0
    %666 = vmatprep.subr.bf16.mxu0 0
    %667 = vmatpush1.bf16.msra.mxu0 %v513
    %668 = vmatprep.subr.bf16.mxu0 0
    %669 = vmatpush1.bf16.msra.mxu0 %v514
    %670 = vmatprep.subr.bf16.mxu0 0
    %671 = vmatpush1.bf16.msra.mxu0 %v515
    %672 = vmatprep.subr.bf16.mxu0 0
    %673 = vmatpush1.bf16.msra.mxu0 %v516
    %674 = vmatprep.subr.bf16.mxu0 0
    %675 = vmatpush1.bf16.msra.mxu0 %v517
    %676 = vmatprep.subr.bf16.mxu0 0
    %677 = vmatpush1.bf16.msra.mxu0 %v518
    %678 = vmatprep.subr.bf16.mxu0 0
    %679 = vmatpush1.bf16.msra.mxu0 %v519
    %680 = vmatprep.subr.bf16.mxu0 0
    %681 = vmatpush1.bf16.msra.mxu0 %v520
    %682 = vmatprep.subr.bf16.mxu0 0
    %683 = vmatpush1.bf16.msra.mxu0 %v521
    %684 = vmatprep.subr.bf16.mxu0 0
    %685 = vmatpush1.bf16.msra.mxu0 %v522
    %686 = vmatprep.subr.bf16.mxu0 0
    %687 = vmatpush1.bf16.msra.mxu0 %v523
    %688 = vmatprep.subr.bf16.mxu0 0
    %689 = vmatpush1.bf16.msra.mxu0 %v524
    %690 = vmatprep.subr.bf16.mxu0 0
    %691 = vmatpush1.bf16.msra.mxu0 %v525
    %692 = vmatprep.subr.bf16.mxu0 0
    %693 = vmatpush1.bf16.msra.mxu0 %v526
    %694 = vmatprep.subr.bf16.mxu0 0
    %695 = vmatpush1.bf16.msra.mxu0 %v527
    %696 = vmatprep.subr.bf16.mxu0 0
    %697 = vmatpush1.bf16.msra.mxu0 %v528
    %698 = vmatprep.mubr.bf16.mxu0 %v228
    %699 = vmatmul.mubr.bf16.gmra.mrb[0].mxu0 %v227
    %v700 = vpop.f32.mrb[0].mxu0
    %v701 = vadd.f32 %v660, %v700
    %v702 = vpop.f32.mrb[0].mxu0
    %v703 = vpop.f32.mrb[0].mxu0
    %v704 = vadd.f32 %v663, %v703
    %v705 = vpop.f32.mrb[0].mxu0
    %706 = vdwg.mxu0
    %707 = vmatprep.subr.bf16.mxu0 0
    %708 = vmatpush1.bf16.msra.mxu0 %v529
    %709 = vmatprep.subr.bf16.mxu0 0
    %710 = vmatpush1.bf16.msra.mxu0 %v530
    %711 = vmatprep.subr.bf16.mxu0 0
    %712 = vmatpush1.bf16.msra.mxu0 %v531
    %713 = vmatprep.subr.bf16.mxu0 0
    %714 = vmatpush1.bf16.msra.mxu0 %v532
    %715 = vmatprep.subr.bf16.mxu0 0
    %716 = vmatpush1.bf16.msra.mxu0 %v533
    %717 = vmatprep.subr.bf16.mxu0 0
    %718 = vmatpush1.bf16.msra.mxu0 %v534
    %719 = vmatprep.subr.bf16.mxu0 0
    %720 = vmatpush1.bf16.msra.mxu0 %v535
    %721 = vmatprep.subr.bf16.mxu0 0
    %722 = vmatpush1.bf16.msra.mxu0 %v536
    %723 = vmatprep.subr.bf16.mxu0 0
    %724 = vmatpush1.bf16.msra.mxu0 %v537
    %725 = vmatprep.subr.bf16.mxu0 0
    %726 = vmatpush1.bf16.msra.mxu0 %v538
    %727 = vmatprep.subr.bf16.mxu0 0
    %728 = vmatpush1.bf16.msra.mxu0 %v539
    %729 = vmatprep.subr.bf16.mxu0 0
    %730 = vmatpush1.bf16.msra.mxu0 %v540
    %731 = vmatprep.subr.bf16.mxu0 0
    %732 = vmatpush1.bf16.msra.mxu0 %v541
    %733 = vmatprep.subr.bf16.mxu0 0
    %734 = vmatpush1.bf16.msra.mxu0 %v542
    %735 = vmatprep.subr.bf16.mxu0 0
    %736 = vmatpush1.bf16.msra.mxu0 %v543
    %737 = vmatprep.subr.bf16.mxu0 0
    %738 = vmatpush1.bf16.msra.mxu0 %v544
    %739 = vmatprep.mubr.bf16.mxu0 %v230
    %740 = vmatmul.mubr.bf16.gmra.mrb[0].mxu0 %v229
    %v741 = vpop.f32.mrb[0].mxu0
    %v742 = vadd.f32 %v701, %v741
    %v743 = vpop.f32.mrb[0].mxu0
    %v744 = vpop.f32.mrb[0].mxu0
    %v745 = vadd.f32 %v704, %v744
    %v746 = vpop.f32.mrb[0].mxu0
    %747 = vdwg.mxu0
    %748 = vmatprep.subr.bf16.mxu0 0
    %749 = vmatpush1.bf16.msra.mxu0 %v545
    %750 = vmatprep.subr.bf16.mxu0 0
    %751 = vmatpush1.bf16.msra.mxu0 %v546
    %752 = vmatprep.subr.bf16.mxu0 0
    %753 = vmatpush1.bf16.msra.mxu0 %v547
    %754 = vmatprep.subr.bf16.mxu0 0
    %755 = vmatpush1.bf16.msra.mxu0 %v548
    %756 = vmatprep.subr.bf16.mxu0 0
    %757 = vmatpush1.bf16.msra.mxu0 %v549
    %758 = vmatprep.subr.bf16.mxu0 0
    %759 = vmatpush1.bf16.msra.mxu0 %v550
    %760 = vmatprep.subr.bf16.mxu0 0
    %761 = vmatpush1.bf16.msra.mxu0 %v551
    %762 = vmatprep.subr.bf16.mxu0 0
    %763 = vmatpush1.bf16.msra.mxu0 %v552
    %764 = vmatprep.subr.bf16.mxu0 0
    %765 = vmatpush1.bf16.msra.mxu0 %v553
    %766 = vmatprep.subr.bf16.mxu0 0
    %767 = vmatpush1.bf16.msra.mxu0 %v554
    %768 = vmatprep.subr.bf16.mxu0 0
    %769 = vmatpush1.bf16.msra.mxu0 %v555
    %770 = vmatprep.subr.bf16.mxu0 0
    %771 = vmatpush1.bf16.msra.mxu0 %v556
    %772 = vmatprep.subr.bf16.mxu0 0
    %773 = vmatpush1.bf16.msra.mxu0 %v557
    %774 = vmatprep.subr.bf16.mxu0 0
    %775 = vmatpush1.bf16.msra.mxu0 %v558
    %776 = vmatprep.subr.bf16.mxu0 0
    %777 = vmatpush1.bf16.msra.mxu0 %v559
    %778 = vmatprep.subr.bf16.mxu0 0
    %779 = vmatpush1.bf16.msra.mxu0 %v560
    %780 = vmatprep.mubr.bf16.mxu0 %v232
    %781 = vmatmul.mubr.bf16.gmra.mrb[0].mxu0 %v231
    %v782 = vpop.f32.mrb[0].mxu0
    %v783 = vadd.f32 %v742, %v782
    %v784 = vpop.f32.mrb[0].mxu0
    %v785 = vpop.f32.mrb[0].mxu0
    %v786 = vadd.f32 %v745, %v785
    %v787 = vpop.f32.mrb[0].mxu0
    %788 = vdwg.mxu0
    %v789 = vmax.f32 %v783, 0.0
    %v790 = vmax.f32 %v786, 0.0
    %v791 = vpack.c.bf16 %v790, %v789
    %v792 = vld [vmem:[#allocation7] sm:$0xf]
    %v793 = vld [vmem:[#allocation7 + $0x4] sm:$0xf]
    %v794 = vld [vmem:[#allocation7 + $0x8] sm:$0xf]
    %v795 = vld [vmem:[#allocation7 + $0xc] sm:$0xf]
    %v796 = vld [vmem:[#allocation7 + $0x10] sm:$0xf]
    %v797 = vld [vmem:[#allocation7 + $0x14] sm:$0xf]
    %v798 = vld [vmem:[#allocation7 + $0x18] sm:$0xf]
    %v799 = vld [vmem:[#allocation7 + $0x1c] sm:$0xf]
    %v800 = vld [vmem:[#allocation7 + $0x20] sm:$0xf]
    %v801 = vld [vmem:[#allocation7 + $0x24] sm:$0xf]
    %v802 = vld [vmem:[#allocation7 + $0x28] sm:$0xf]
    %v803 = vld [vmem:[#allocation7 + $0x2c] sm:$0xf]
    %v804 = vld [vmem:[#allocation7 + $0x30] sm:$0xf]
    %v805 = vld [vmem:[#allocation7 + $0x34] sm:$0xf]
    %v806 = vld [vmem:[#allocation7 + $0x38] sm:$0xf]
    %v807 = vld [vmem:[#allocation7 + $0x3c] sm:$0xf]
    %v808 = vld [vmem:[%s3 + $0x1] sm:$0x1]
    %v809 = vlaneseq
    %v810 = vshrl.u32 %v809, 7
    %v811 = vsub.s32 0, %v810
    %v812 = vrot.slane %v808, %v811
    %v829 = vunpack.c.l.b16 %v792
    %v830 = vunpack.c.l.b16 %v793
    %v831 = vunpack.c.l.b16 %v794
    %v832 = vunpack.c.l.b16 %v795
    %v833 = vunpack.c.l.b16 %v796
    %v834 = vunpack.c.l.b16 %v797
    %v835 = vunpack.c.l.b16 %v798
    %v836 = vunpack.c.l.b16 %v799
    %v837 = vunpack.c.l.b16 %v800
    %v838 = vunpack.c.l.b16 %v801
    %v839 = vunpack.c.l.b16 %v802
    %v840 = vunpack.c.l.b16 %v803
    %v841 = vunpack.c.l.b16 %v804
    %v842 = vunpack.c.l.b16 %v805
    %v843 = vunpack.c.l.b16 %v806
    %v844 = vunpack.c.l.b16 %v807
    %v845 = vpack.c.b16 %v830, %v829
    %v846 = vpack.c.b16 %v832, %v831
    %v847 = vpack.c.b16 %v834, %v833
    %v848 = vpack.c.b16 %v836, %v835
    %v849 = vpack.c.b16 %v838, %v837
    %v850 = vpack.c.b16 %v840, %v839
    %v851 = vpack.c.b16 %v842, %v841
    %v852 = vpack.c.b16 %v844, %v843
    %861 = vmatprep.subr.bf16.mxu0 0
    %862 = vmatpush1.bf16.msra.mxu0 %v845
    %863 = vmatprep.subr.bf16.mxu0 0
    %864 = vmatpush1.bf16.msra.mxu0 %v846
    %865 = vmatprep.subr.bf16.mxu0 0
    %866 = vmatpush1.bf16.msra.mxu0 %v847
    %867 = vmatprep.subr.bf16.mxu0 0
    %868 = vmatpush1.bf16.msra.mxu0 %v848
    %869 = vmatprep.subr.bf16.mxu0 0
    %870 = vmatpush1.bf16.msra.mxu0 %v849
    %871 = vmatprep.subr.bf16.mxu0 0
    %872 = vmatpush1.bf16.msra.mxu0 %v850
    %873 = vmatprep.subr.bf16.mxu0 0
    %874 = vmatpush1.bf16.msra.mxu0 %v851
    %875 = vmatprep.subr.bf16.mxu0 0
    %876 = vmatpush1.bf16.msra.mxu0 %v852
    %877 = vmatprep.subr.bf16.mxu0 0
    %878 = vmatpush1.bf16.msra.mxu0 0
    %879 = vmatprep.subr.bf16.mxu0 0
    %880 = vmatpush1.bf16.msra.mxu0 0
    %881 = vmatprep.subr.bf16.mxu0 0
    %882 = vmatpush1.bf16.msra.mxu0 0
    %883 = vmatprep.subr.bf16.mxu0 0
    %884 = vmatpush1.bf16.msra.mxu0 0
    %885 = vmatprep.subr.bf16.mxu0 0
    %886 = vmatpush1.bf16.msra.mxu0 0
    %887 = vmatprep.subr.bf16.mxu0 0
    %888 = vmatpush1.bf16.msra.mxu0 0
    %889 = vmatprep.subr.bf16.mxu0 0
    %890 = vmatpush1.bf16.msra.mxu0 0
    %891 = vmatprep.subr.bf16.mxu0 0
    %892 = vmatpush1.bf16.msra.mxu0 0
    %893 = vmatprep.mubr.bf16.mxu0 0
    %894 = vmatmul.mubr.bf16.gmra.mrb[0].mxu0 %v791
    %v895 = vpop.f32.mrb[0].mxu0
    %v896 = vadd.f32 %v812, %v895
    %v897 = vpop.f32.mrb[0].mxu0
    %v898 = vpop.f32.mrb[0].mxu0
    %v899 = vadd.f32 %v812, %v898
    %v900 = vpop.f32.mrb[0].mxu0
    %901 = vdwg.mxu0
    %v902 = vmax.f32 %v896, 0.0
    %v903 = vmax.f32 %v899, 0.0
    %v904 = vpack.c.bf16 %v903, %v902
    %s905 = scalar_lea.vmem [#allocation7], 64
    %v906 = vld [vmem:[%s905] sm:$0xf]
    %v907 = vld [vmem:[%s905 + $0x4] sm:$0xf]
    %v908 = vld [vmem:[%s905 + $0x8] sm:$0xf]
    %v909 = vld [vmem:[%s905 + $0xc] sm:$0xf]
    %v910 = vld [vmem:[%s905 + $0x10] sm:$0xf]
    %v911 = vld [vmem:[%s905 + $0x14] sm:$0xf]
    %v912 = vld [vmem:[%s905 + $0x18] sm:$0xf]
    %v913 = vld [vmem:[%s905 + $0x1c] sm:$0xf]
    %v914 = vld [vmem:[%s905 + $0x20] sm:$0xf]
    %v915 = vld [vmem:[%s905 + $0x24] sm:$0xf]
    %v916 = vld [vmem:[%s905 + $0x28] sm:$0xf]
    %v917 = vld [vmem:[%s905 + $0x2c] sm:$0xf]
    %v918 = vld [vmem:[%s905 + $0x30] sm:$0xf]
    %v919 = vld [vmem:[%s905 + $0x34] sm:$0xf]
    %v920 = vld [vmem:[%s905 + $0x38] sm:$0xf]
    %v921 = vld [vmem:[%s905 + $0x3c] sm:$0xf]
    %v922 = vld [vmem:[%s3 + $0x2] sm:$0x1]
    %v923 = vlaneseq
    %v924 = vshrl.u32 %v923, 7
    %v925 = vsub.s32 0, %v924
    %v926 = vrot.slane %v922, %v925
    %v943 = vunpack.c.l.b16 %v906
    %v944 = vunpack.c.l.b16 %v907
    %v945 = vunpack.c.l.b16 %v908
    %v946 = vunpack.c.l.b16 %v909
    %v947 = vunpack.c.l.b16 %v910
    %v948 = vunpack.c.l.b16 %v911
    %v949 = vunpack.c.l.b16 %v912
    %v950 = vunpack.c.l.b16 %v913
    %v951 = vunpack.c.l.b16 %v914
    %v952 = vunpack.c.l.b16 %v915
    %v953 = vunpack.c.l.b16 %v916
    %v954 = vunpack.c.l.b16 %v917
    %v955 = vunpack.c.l.b16 %v918
    %v956 = vunpack.c.l.b16 %v919
    %v957 = vunpack.c.l.b16 %v920
    %v958 = vunpack.c.l.b16 %v921
    %v959 = vpack.c.b16 %v944, %v943
    %v960 = vpack.c.b16 %v946, %v945
    %v961 = vpack.c.b16 %v948, %v947
    %v962 = vpack.c.b16 %v950, %v949
    %v963 = vpack.c.b16 %v952, %v951
    %v964 = vpack.c.b16 %v954, %v953
    %v965 = vpack.c.b16 %v956, %v955
    %v966 = vpack.c.b16 %v958, %v957
    %975 = vmatprep.subr.bf16.mxu0 0
    %976 = vmatpush1.bf16.msra.mxu0 %v959
    %977 = vmatprep.subr.bf16.mxu0 0
    %978 = vmatpush1.bf16.msra.mxu0 %v960
    %979 = vmatprep.subr.bf16.mxu0 0
    %980 = vmatpush1.bf16.msra.mxu0 %v961
    %981 = vmatprep.subr.bf16.mxu0 0
    %982 = vmatpush1.bf16.msra.mxu0 %v962
    %983 = vmatprep.subr.bf16.mxu0 0
    %984 = vmatpush1.bf16.msra.mxu0 %v963
    %985 = vmatprep.subr.bf16.mxu0 0
    %986 = vmatpush1.bf16.msra.mxu0 %v964
    %987 = vmatprep.subr.bf16.mxu0 0
    %988 = vmatpush1.bf16.msra.mxu0 %v965
    %989 = vmatprep.subr.bf16.mxu0 0
    %990 = vmatpush1.bf16.msra.mxu0 %v966
    %991 = vmatprep.subr.bf16.mxu0 0
    %992 = vmatpush1.bf16.msra.mxu0 0
    %993 = vmatprep.subr.bf16.mxu0 0
    %994 = vmatpush1.bf16.msra.mxu0 0
    %995 = vmatprep.subr.bf16.mxu0 0
    %996 = vmatpush1.bf16.msra.mxu0 0
    %997 = vmatprep.subr.bf16.mxu0 0
    %998 = vmatpush1.bf16.msra.mxu0 0
    %999 = vmatprep.subr.bf16.mxu0 0
    %1000 = vmatpush1.bf16.msra.mxu0 0
    %1001 = vmatprep.subr.bf16.mxu0 0
    %1002 = vmatpush1.bf16.msra.mxu0 0
    %1003 = vmatprep.subr.bf16.mxu0 0
    %1004 = vmatpush1.bf16.msra.mxu0 0
    %1005 = vmatprep.subr.bf16.mxu0 0
    %1006 = vmatpush1.bf16.msra.mxu0 0
    %1007 = vmatprep.mubr.bf16.mxu0 0
    %1008 = vmatmul.mubr.bf16.gmra.mrb[0].mxu0 %v904
    %v1009 = vpop.f32.mrb[0].mxu0
    %v1010 = vadd.f32 %v926, %v1009
    %v1011 = vpop.f32.mrb[0].mxu0
    %v1012 = vpop.f32.mrb[0].mxu0
    %v1013 = vadd.f32 %v926, %v1012
    %v1014 = vpop.f32.mrb[0].mxu0
    %1015 = vdwg.mxu0
    %1016 = vst [vmem:[#allocation8] sm:$0xff] %v1010
    %1017 = vst [vmem:[#allocation8 + $0x8] sm:$0xff] %v1013
    // Predicated region
    $region30: #{tpu_custom_call.1} parent=1 // pred_check
      _
    $region31: #{tpu_custom_call.1} parent=1 // pred_check_branch
      %1019 = sbr.rel (0) target = $region33
    $region32: #{tpu_custom_call.1} parent=1 // pred_region
      %s1021 = ssub.s32 256, 256
      %1022 = vsyncadd [#allocation4], %s1021
      %s1023 = sshll.u32 [#allocation8], 4
      %s1024 = int_to_ptr.vmem [resolvable:$true] %s1023
      %1029 = dma.vmem_to_hbm [thread:$0]  %s1024, 256, %s4, [#allocation4], 128, 128, 8
    $region33: #{tpu_custom_call.1} parent=1 // pred_fallthru
      _
    // Predicated region
    $region34: #{tpu_custom_call.1} parent=1 // pred_check
      _
    $region35: #{tpu_custom_call.1} parent=1 // pred_check_branch
      %1031 = sbr.rel (0) target = $region37
    $region36: #{tpu_custom_call.1} parent=1 // pred_region
      %1032 = dma.done [#allocation4], 256
    $region37: #{tpu_custom_call.1} parent=1 // pred_fallthru
      _
    %1033 = vsyncpa [#allocation3], 1
    %1034 = vsyncpa [#allocation6], 1
    %1035 = vsyncpa [#allocation4], 1

</llo_original>
